<compile_context>
chip_gen: v5e
topology: v5e:2x2
jax: 0.10.0
libtpu: 0.0.40
codegen_flags: <defaults>
</compile_context>

<pallas_src>
import jax
import jax.numpy as jnp
from jax.experimental import pallas as pl
from jax.experimental.pallas import tpu as pltpu

_EPS = 1e-6  # torch.nn.PairwiseDistance default eps (added elementwise to the diff)


def _acl_kernel(anchor_ref, pos_ref, neg_ref, margin_ref, out_ref):
    """One (tb, D) batch tile: per-row squared / clamped distances -> (tb, 1)."""
    a = anchor_ref[...].astype(jnp.float32)
    p = pos_ref[...].astype(jnp.float32)
    n = neg_ref[...].astype(jnp.float32)

    diff_ap = a - p + _EPS
    diff_an = a - n + _EPS
    d_ap_sq = jnp.sum(diff_ap * diff_ap, axis=1, keepdims=True)   # (tb, 1)
    d_an_sq = jnp.sum(diff_an * diff_an, axis=1, keepdims=True)   # (tb, 1)
    d_an = jnp.sqrt(d_an_sq)   # only the negative branch needs the actual distance

    clamped = jnp.maximum(margin_ref[...] - d_an, 0.0)
    # 0.5 * D_ap^2 == 0.5 * sum(diff_ap^2): sqrt-then-square cancels exactly.
    out_ref[...] = 0.5 * d_ap_sq + 0.5 * (clamped * clamped)


def _round_down(x, m):
    return (x // m) * m


def _round_up(x, m):
    return -(-x // m) * m


def _vmem_limit_bytes(default=40 * 1024 * 1024):
    # Per-generation safety: stay well below v7x's 64 MiB/TC while still
    # overriding v5e's 16 MiB scoped default.  Roofline saturates at ~2-4 MiB
    # tiles, so a larger limit on v5e/v6e (128 MiB VMEM) buys nothing.
    try:
        cap = int(pltpu.get_tpu_info().vmem_capacity_bytes)
        return min(default, (cap * 3) // 4)
    except Exception:   # best-effort query only; default is safe everywhere
        return default


def adaptive_contrastive_loss(anchor, positive, negative,
                              gt_anchor_positive, gt_anchor_negative,
                              *, block_batch=None,
                              vmem_budget_bytes=24 * 1024 * 1024):
    """anchor/positive/negative: (B, D); gt_*: (B,). Returns loss of shape (B,)."""
    B, D = anchor.shape
    itemsize = jnp.dtype(anchor.dtype).itemsize
    # Native sublane multiple for the embedding dtype: f32 -> 8, bf16 -> 16, int8 -> 32.
    sub = max(8, 32 // itemsize)

    # margin is a B-element elementwise op: compute it once in the wrapper (it
    # fuses into the surrounding XLA graph) instead of DMAing two gt streams.
    margin = 0.1 + (gt_anchor_positive.astype(jnp.float32)
                    - gt_anchor_negative.astype(jnp.float32)) * 0.75
    margin2d = margin.reshape(B, 1)

    if block_batch is not None:
        tb = block_batch
    else:
        # Double-buffered bytes per batch row: 3 embedding rows plus the
        # lane-padded (tb, 1) margin-in and loss-out blocks (128 lanes * 4 B each).
        per_row = 2 * (3 * D * itemsize + 2 * 128 * 4)
        tb = max(sub, _round_down(vmem_budget_bytes // per_row, sub))
        tb = min(tb, 2048)
        if B >= 256:
            # Keep at least 2 grid iterations so ("parallel",) can shard the
            # batch across v7x's two TensorCores; on single-TC v5e/v6e this is
            # only one extra ~0.35 us pipeline step.
            tb = min(tb, _round_up(pl.cdiv(B, 2), sub))
    if tb >= B:
        tb = B                      # full-extent block: any B is a legal shape
    elif tb % sub != 0:
        tb = max(sub, _round_down(tb, sub))
    grid = (pl.cdiv(B, tb),)

    emb_spec = pl.BlockSpec((tb, D), lambda i: (i, 0))
    vec_spec = pl.BlockSpec((tb, 1), lambda i: (i, 0))

    cost = pl.CostEstimate(
        flops=8 * B * D,
        transcendentals=B,
        bytes_accessed=3 * B * D * itemsize + 2 * B * 4,
    )
    compiler_params = pltpu.CompilerParams(
        dimension_semantics=("parallel",),
        vmem_limit_bytes=_vmem_limit_bytes(),
    )

    out2d = pl.pallas_call(
        _acl_kernel,
        out_shape=jax.ShapeDtypeStruct((B, 1), jnp.float32),
        grid=grid,
        in_specs=[emb_spec, emb_spec, emb_spec, vec_spec],
        out_specs=vec_spec,
        compiler_params=compiler_params,
        cost_estimate=cost,
    )(anchor, positive, negative, margin2d)
    return out2d.reshape(B)


def _reference(anchor, positive, negative, gt_ap, gt_an):
    a = anchor.astype(jnp.float32)
    p = positive.astype(jnp.float32)
    n = negative.astype(jnp.float32)
    d_ap = jnp.sqrt(jnp.sum((a - p + _EPS) ** 2, axis=-1))
    d_an = jnp.sqrt(jnp.sum((a - n + _EPS) ** 2, axis=-1))
    margin = 0.1 + (gt_ap.astype(jnp.float32) - gt_an.astype(jnp.float32)) * 0.75
    return 0.5 * d_ap ** 2 + 0.5 * jnp.maximum(margin - d_an, 0.0) ** 2


if __name__ == "__main__":
    key = jax.random.PRNGKey(0)

    def make(B, D, k, dtype=jnp.float32):
        k1, k2, k3, k4, k5 = jax.random.split(k, 5)
        return (jax.random.normal(k1, (B, D)).astype(dtype),
                jax.random.normal(k2, (B, D)).astype(dtype),
                jax.random.normal(k3, (B, D)).astype(dtype),
                jax.random.uniform(k4, (B,), dtype=jnp.float32),
                jax.random.uniform(k5, (B,), dtype=jnp.float32))

    cases = [
        dict(B=8,   D=32,  dtype=jnp.float32,  block_batch=None),  # small D, single block (no wrapper transpose)
        dict(B=8,   D=256, dtype=jnp.float32,  block_batch=None),  # single block, larger D
        dict(B=300, D=64,  dtype=jnp.float32,  block_batch=128),   # multi-tile grid + ragged tail
        dict(B=272, D=32,  dtype=jnp.float32,  block_batch=None),  # auto split into >=2 tiles (v7x 2-TC path)
        dict(B=40,  D=128, dtype=jnp.bfloat16, block_batch=16),    # packed-dtype sublane tiling + ragged tail
    ]
    keys = jax.random.split(key, len(cases))
    for cfg, k in zip(cases, keys):
        args = make(cfg["B"], cfg["D"], k, cfg["dtype"])
        out = adaptive_contrastive_loss(*args, block_batch=cfg["block_batch"])
        out = jax.block_until_ready(out)
        ref = _reference(*args)
        assert out.shape == (cfg["B"],), (out.shape, cfg)
        assert jnp.allclose(out, ref, atol=1e-4, rtol=1e-4), (cfg, out, ref)

    print("KERNEL_OK")
</pallas_src>

<mosaic_0001>
module attributes {stable_mosaic.version = 11 : i64} {
  func.func @_acl_kernel(%arg0: i32, %arg1: memref<8x32xf32, #tpu.memory_space<vmem>>, %arg2: memref<8x32xf32, #tpu.memory_space<vmem>>, %arg3: memref<8x32xf32, #tpu.memory_space<vmem>>, %arg4: memref<8x1xf32, #tpu.memory_space<vmem>>, %arg5: memref<8x1xf32, #tpu.memory_space<vmem>>) attributes {dimension_semantics = [#tpu.dimension_semantics<parallel>], iteration_bounds = array<i64: 1>, scalar_prefetch = 0 : i64, scratch_operands = 0 : i64, tpu.core_type = #tpu.core_type<tc>, window_params = [{transform_indices = @transform_0, window_bounds = array<i64: 8, 32>}, {transform_indices = @transform_1, window_bounds = array<i64: 8, 32>}, {transform_indices = @transform_2, window_bounds = array<i64: 8, 32>}, {transform_indices = @transform_3, window_bounds = array<i64: 8, 1>}, {transform_indices = @transform_4, window_bounds = array<i64: 8, 1>}]} {
    %c0 = arith.constant 0 : index
    %c0_0 = arith.constant 0 : index
    %0 = vector.load %arg1[%c0, %c0_0] : memref<8x32xf32, #tpu.memory_space<vmem>>, vector<8x32xf32>
    %c0_1 = arith.constant 0 : index
    %c0_2 = arith.constant 0 : index
    %1 = vector.load %arg2[%c0_1, %c0_2] : memref<8x32xf32, #tpu.memory_space<vmem>>, vector<8x32xf32>
    %c0_3 = arith.constant 0 : index
    %c0_4 = arith.constant 0 : index
    %2 = vector.load %arg3[%c0_3, %c0_4] : memref<8x32xf32, #tpu.memory_space<vmem>>, vector<8x32xf32>
    %3 = arith.subf %0, %1 : vector<8x32xf32>
    %cst = arith.constant 9.99999997E-7 : f32
    %4 = vector.broadcast %cst : f32 to vector<8x32xf32>
    %5 = arith.addf %3, %4 : vector<8x32xf32>
    %6 = arith.subf %0, %2 : vector<8x32xf32>
    %cst_5 = arith.constant 9.99999997E-7 : f32
    %7 = vector.broadcast %cst_5 : f32 to vector<8x32xf32>
    %8 = arith.addf %6, %7 : vector<8x32xf32>
    %9 = arith.mulf %5, %5 : vector<8x32xf32>
    %cst_6 = arith.constant dense<0.000000e+00> : vector<8xf32>
    %10 = vector.multi_reduction <add>, %9, %cst_6 [1] : vector<8x32xf32> to vector<8xf32>
    %11 = vector.shape_cast %10 : vector<8xf32> to vector<8x1xf32>
    %12 = arith.mulf %8, %8 : vector<8x32xf32>
    %cst_7 = arith.constant dense<0.000000e+00> : vector<8xf32>
    %13 = vector.multi_reduction <add>, %12, %cst_7 [1] : vector<8x32xf32> to vector<8xf32>
    %14 = vector.shape_cast %13 : vector<8xf32> to vector<8x1xf32>
    %15 = math.sqrt %14 : vector<8x1xf32>
    %c0_8 = arith.constant 0 : index
    %c0_9 = arith.constant 0 : index
    %16 = vector.load %arg4[%c0_8, %c0_9] : memref<8x1xf32, #tpu.memory_space<vmem>>, vector<8x1xf32>
    %17 = arith.subf %16, %15 : vector<8x1xf32>
    %cst_10 = arith.constant 0.000000e+00 : f32
    %18 = vector.broadcast %cst_10 : f32 to vector<8x1xf32>
    %19 = arith.maximumf %17, %18 : vector<8x1xf32>
    %cst_11 = arith.constant 5.000000e-01 : f32
    %20 = vector.broadcast %cst_11 : f32 to vector<8x1xf32>
    %21 = arith.mulf %20, %11 : vector<8x1xf32>
    %22 = arith.mulf %19, %19 : vector<8x1xf32>
    %cst_12 = arith.constant 5.000000e-01 : f32
    %23 = vector.broadcast %cst_12 : f32 to vector<8x1xf32>
    %24 = arith.mulf %23, %22 : vector<8x1xf32>
    %25 = arith.addf %21, %24 : vector<8x1xf32>
    %c0_13 = arith.constant 0 : index
    %c0_14 = arith.constant 0 : index
    %26 = vector.load %arg5[%c0_13, %c0_14] : memref<8x1xf32, #tpu.memory_space<vmem>>, vector<8x1xf32>
    tpu.vector_store %arg5[%c0_13, %c0_14], %25 {strides = array<i32>} : memref<8x1xf32, #tpu.memory_space<vmem>>, vector<8x1xf32>,
    return
  }
  func.func @transform_0(%arg0: i32) -> (i32, i32) {
    %c0_i32 = arith.constant 0 : i32
    %c0_i32_0 = arith.constant 0 : i32
    return %arg0, %c0_i32 : i32, i32
  }
  func.func @transform_1(%arg0: i32) -> (i32, i32) {
    %c0_i32 = arith.constant 0 : i32
    %c0_i32_0 = arith.constant 0 : i32
    return %arg0, %c0_i32 : i32, i32
  }
  func.func @transform_2(%arg0: i32) -> (i32, i32) {
    %c0_i32 = arith.constant 0 : i32
    %c0_i32_0 = arith.constant 0 : i32
    return %arg0, %c0_i32 : i32, i32
  }
  func.func @transform_3(%arg0: i32) -> (i32, i32) {
    %c0_i32 = arith.constant 0 : i32
    %c0_i32_0 = arith.constant 0 : i32
    return %arg0, %c0_i32 : i32, i32
  }
  func.func @transform_4(%arg0: i32) -> (i32, i32) {
    %c0_i32 = arith.constant 0 : i32
    %c0_i32_0 = arith.constant 0 : i32
    return %arg0, %c0_i32 : i32, i32
  }
}

</mosaic_0001>

<llo_original>
// kernel: tpu_custom_call.1
$region0: #{tpu_custom_call.1}
  #allocation0 [shape = 'u32[]', space=smem, size = 0x4, offset = 0x4, fixed_abs, tag = 'smem constant byte address 0x4 - core index']
  #allocation1 [shape = 'u32[72,128]{1,0:T(1,128)}', space=vmem, size = 0x9000, scoped, tag = 'internal scratch']
  %s0 = inlined_call_operand.vmem [shape: f32[8,32], index: 0, kind: input, shape index: {}]
  %s1 = inlined_call_operand.hbm [shape: f32[8,32], index: 1, kind: input, shape index: {}]
  %s2 = inlined_call_operand.hbm [shape: f32[8,32], index: 2, kind: input, shape index: {}]
  %s3 = inlined_call_operand.vmem [shape: f32[8,1], index: 3, kind: input, shape index: {}]
  %s4 = inlined_call_operand.vmem [shape: f32[8,1], index: 4, kind: output, shape index: {}]
  %s5 = sld [smem:[#allocation0]]
  $region34: #{tpu_custom_call.1} parent=0
    _
  %s7 = ssub.s32 1, %s5
  %s8 = scalar_select 0, %s7, %s5
  $region1: #{tpu_custom_call.1} parent=0
    #allocation2 [shape = 'u8[4096]{0}', space=vmem, size = 0x1000, scoped, tag = 'input window, operand 1, single buffered']
    #allocation3 [shape = 's32[1]{0}', space=sflag, size = 0x4, scoped, tag = 'scoped memory for tpu_custom_call.1']
    #allocation4 [shape = 'u8[4096]{0}', space=vmem, size = 0x1000, scoped, tag = 'input window, operand 2, single buffered']
    #allocation5 [shape = 's32[1]{0}', space=sflag, size = 0x4, scoped, tag = 'scoped memory for tpu_custom_call.1']
    %9 = vsyncpa [#allocation3], 0
    %10 = vsyncpa [#allocation5], 0
    // Predicated region
    $region2: #{tpu_custom_call.1} parent=1 // pred_check
      _
    $region3: #{tpu_custom_call.1} parent=1 // pred_check_branch
      %12 = sbr.rel (0) target = $region5
    $region4: #{tpu_custom_call.1} parent=1 // pred_region
      _
    $region5: #{tpu_custom_call.1} parent=1 // pred_fallthru
      _
    // Predicated region
    $region6: #{tpu_custom_call.1} parent=1 // pred_check
      _
    $region7: #{tpu_custom_call.1} parent=1 // pred_check_branch
      %14 = sbr.rel (0) target = $region9
    $region8: #{tpu_custom_call.1} parent=1 // pred_region
      %16 = vsyncadd [#allocation3], 0
      %s18 = sshll.u32 %s1, 4
      %s19 = int_to_ptr.hbm [resolvable:$true] %s18
      %s20 = sshll.u32 [#allocation2], 4
      %s21 = int_to_ptr.vmem [resolvable:$true] %s20
      %23 = dma.hbm_to_vmem [thread:$0]  %s19, 128, %s21, [#allocation3]
    $region9: #{tpu_custom_call.1} parent=1 // pred_fallthru
      _
    // Predicated region
    $region10: #{tpu_custom_call.1} parent=1 // pred_check
      _
    $region11: #{tpu_custom_call.1} parent=1 // pred_check_branch
      %25 = sbr.rel (0) target = $region13
    $region12: #{tpu_custom_call.1} parent=1 // pred_region
      %27 = vsyncadd [#allocation5], 0
      %s29 = sshll.u32 %s2, 4
      %s30 = int_to_ptr.hbm [resolvable:$true] %s29
      %s31 = sshll.u32 [#allocation4], 4
      %s32 = int_to_ptr.vmem [resolvable:$true] %s31
      %34 = dma.hbm_to_vmem [thread:$0]  %s30, 128, %s32, [#allocation5]
    $region13: #{tpu_custom_call.1} parent=1 // pred_fallthru
      _
    // Predicated region
    $region14: #{tpu_custom_call.1} parent=1 // pred_check
      _
    $region15: #{tpu_custom_call.1} parent=1 // pred_check_branch
      %36 = sbr.rel (0) target = $region17
    $region16: #{tpu_custom_call.1} parent=1 // pred_region
      _
    $region17: #{tpu_custom_call.1} parent=1 // pred_fallthru
      _
    // Predicated region
    $region18: #{tpu_custom_call.1} parent=1 // pred_check
      _
    $region19: #{tpu_custom_call.1} parent=1 // pred_check_branch
      %38 = sbr.rel (0) target = $region21
    $region20: #{tpu_custom_call.1} parent=1 // pred_region
      %40 = dma.done [#allocation3], 128
    $region21: #{tpu_custom_call.1} parent=1 // pred_fallthru
      _
    // Predicated region
    $region22: #{tpu_custom_call.1} parent=1 // pred_check
      _
    $region23: #{tpu_custom_call.1} parent=1 // pred_check_branch
      %42 = sbr.rel (0) target = $region25
    $region24: #{tpu_custom_call.1} parent=1 // pred_region
      %44 = dma.done [#allocation5], 128
    $region25: #{tpu_custom_call.1} parent=1 // pred_fallthru
      _
    %v45 = vld [vmem:[%s0] sm:$0xff]
    %v46 = vld [vmem:[#allocation2] sm:$0xff]
    %v47 = vld [vmem:[#allocation4] sm:$0xff]
    %v48 = vsub.f32 %v45, %v46
    %v49 = vadd.f32 %v48, 1e-06
    %v50 = vsub.f32 %v45, %v47
    %v51 = vadd.f32 %v50, 1e-06
    %v52 = vmul.f32 %v49, %v49
    %vm53 = vcmask 261120
    %v54 = vsel %vm53, %v52, 0.0
    %55 = vadd.xlane.f32.xlu0 %v54
    %v56 = vpop.xlane.xlu0 %55
    %v57 = vmul.f32 %v51, %v51
    %v58 = vsel %vm53, %v57, 0.0
    %59 = vadd.xlane.f32.xlu0 %v58
    %v60 = vpop.xlane.xlu0 %59
    %v61 = vrsqrt.pop %v60
    %v62 = vmul.f32 %v61, %v60
    %v63 = vmul.f32 %v62, %v61
    %v64 = vmul.f32 0.5, %v63
    %v65 = vsub.f32 1.5, %v64
    %v66 = vmul.f32 %v61, %v65
    %v67 = vmul.f32 %v60, %v66
    %vm68 = vcmp.eq.f32.partialorder %v60, inf
    %v69 = vsel %vm68, %v60, %v67
    %vm70 = vcmp.eq.f32.partialorder %v60, 0.0
    %v71 = vand.u32 %v60, 2147483648
    %v72 = vsel %vm70, %v71, %v69
    %v73 = vld [vmem:[%s3] sm:$0xff]
    %v74 = vsub.f32 %v73, %v72
    %v75 = vmax.f32 %v74, 0.0
    %v76 = vmul.f32 %v56, 0.5
    %v77 = vmul.f32 %v75, %v75
    %v78 = vmul.f32 %v77, 0.5
    %v79 = vadd.f32 %v76, %v78
    %vm80 = vcmask 7168
    %81 = vst.msk [vmem:[%s4] sm:$0xff] %vm80, %v79
    // Predicated region
    $region26: #{tpu_custom_call.1} parent=1 // pred_check
      _
    $region27: #{tpu_custom_call.1} parent=1 // pred_check_branch
      %83 = sbr.rel (0) target = $region29
    $region28: #{tpu_custom_call.1} parent=1 // pred_region
      _
    $region29: #{tpu_custom_call.1} parent=1 // pred_fallthru
      _
    // Predicated region
    $region30: #{tpu_custom_call.1} parent=1 // pred_check
      _
    $region31: #{tpu_custom_call.1} parent=1 // pred_check_branch
      %85 = sbr.rel (0) target = $region33
    $region32: #{tpu_custom_call.1} parent=1 // pred_region
      _
    $region33: #{tpu_custom_call.1} parent=1 // pred_fallthru
      _
    %86 = vsyncpa [#allocation3], 1
    %87 = vsyncpa [#allocation5], 1

</llo_original>
